<compile_context>
chip_gen: v7x
topology: tpu7x:2x2x1
jax: 0.10.0
libtpu: 0.0.40
codegen_flags: <defaults>
</compile_context>

<pallas_src>
import functools

import jax
import jax.numpy as jnp
from jax.experimental import pallas as pl
from jax.experimental.pallas import tpu as pltpu


def _round_up(x, m):
    return ((x + m - 1) // m) * m


def _vmem_budget_bytes():
    """Generation-aware VMEM cap (trace-time query, with a safe fallback)."""
    try:
        cap = int(pltpu.get_tpu_info().vmem_capacity_bytes)
    except Exception:
        cap = 64 * 1024 * 1024  # conservative: v7x per-TensorCore capacity
    return cap * 3 // 4          # leave headroom for Mosaic-internal scratch


def _logreg_kernel(x_ref, w_ref, b_ref, o_ref):
    # x_ref: (TM, K)   w_ref: (N, K) PyTorch layout   b_ref: (1, N)
    # Contract the last dims of both operands (trans_b form) on the MXU with
    # f32 accumulation; no wrapper-side weight transpose needed.
    logits = jax.lax.dot_general(
        x_ref[...], w_ref[...],
        dimension_numbers=(((1,), (1,)), ((), ())),
        preferred_element_type=jnp.float32,
    )
    logits = logits + b_ref[...]                     # (TM, N) + (1, N)
    # Sigmoid epilogue: exp lands on the EUP slot, essentially free next to the
    # HBM traffic in this mem-bound kernel.
    o_ref[...] = (1.0 / (1.0 + jnp.exp(-logits))).astype(o_ref.dtype)


def _logreg_kernel_ktiled(x_ref, w_ref, b_ref, o_ref, acc_ref):
    # K-tiled variant: input_dim runs along an 'arbitrary' grid axis and is
    # accumulated in an f32 VMEM scratch (used only when full K won't fit).
    k = pl.program_id(1)

    @pl.when(k == 0)
    def _():
        acc_ref[...] = jnp.zeros_like(acc_ref)

    acc_ref[...] += jax.lax.dot_general(
        x_ref[...], w_ref[...],
        dimension_numbers=(((1,), (1,)), ((), ())),
        preferred_element_type=jnp.float32,
    )

    @pl.when(k == pl.num_programs(1) - 1)
    def _():
        logits = acc_ref[...] + b_ref[...]
        o_ref[...] = (1.0 / (1.0 + jnp.exp(-logits))).astype(o_ref.dtype)


@functools.partial(jax.jit, static_argnames=("tm",))
def logistic_regression(x, weight, bias, *, tm=1024):
    """sigmoid(x @ weight.T + bias) — forward of nn.Linear + nn.Sigmoid.

    Args:
      x:      (batch, input_dim)       float32
      weight: (output_dim, input_dim)  float32  (PyTorch nn.Linear layout)
      bias:   (output_dim,)            float32
    Returns:
      (batch, output_dim) float32
    """
    batch, input_dim = x.shape
    output_dim = weight.shape[0]
    bias2d = bias.reshape(1, output_dim)

    # VMEM-layout-padded dims for the budget estimate only (no data is padded).
    kp = _round_up(input_dim, 128)       # lane padding of K
    n_sl = _round_up(output_dim, 8)      # sublane padding of weight's first dim
    n_ln = _round_up(output_dim, 128)    # lane padding of N (output / bias)

    budget = _vmem_budget_bytes()

    # --- Batch tile: as big as VMEM allows (HBM-bound kernel), multiple of 8.
    tm_eff = max(8, _round_up(min(tm, _round_up(batch, 8)), 8))
    # v7x has 2 TensorCores: make sure the 'parallel' batch axis has >=2 steps
    # for reasonably large batches so both cores get work.
    if batch >= 512 and pl.cdiv(batch, tm_eff) < 2:
        tm_eff = max(8, _round_up(pl.cdiv(batch, 2), 8))

    def simple_need(t):
        # Every block (including the "resident" weight/bias) is double-buffered
        # by the pipeline.
        return 4 * (2 * t * kp + 2 * n_sl * kp + 2 * n_ln + 2 * t * n_ln)

    while tm_eff > 8 and simple_need(tm_eff) > budget:
        tm_eff = max(8, _round_up(tm_eff // 2, 8))

    if simple_need(tm_eff) <= budget:
        # --- Single-K-block path (common case). ------------------------------
        return pl.pallas_call(
            _logreg_kernel,
            out_shape=jax.ShapeDtypeStruct((batch, output_dim), x.dtype),
            grid=(pl.cdiv(batch, tm_eff),),
            in_specs=[
                pl.BlockSpec((tm_eff, input_dim), lambda i: (i, 0)),      # x tile
                pl.BlockSpec((output_dim, input_dim), lambda i: (0, 0)),  # weight
                pl.BlockSpec((1, output_dim), lambda i: (0, 0)),          # bias
            ],
            out_specs=pl.BlockSpec((tm_eff, output_dim), lambda i: (i, 0)),
            compiler_params=pltpu.CompilerParams(
                dimension_semantics=("parallel",),
                vmem_limit_bytes=budget,
            ),
        )(x, weight, bias2d)

    # --- K-tiled fallback: input_dim too large to keep resident in VMEM. -----
    def ktiled_need(t, tkk):
        return 4 * (2 * t * tkk + 2 * n_sl * tkk + 2 * n_ln
                    + 2 * t * n_ln + t * n_ln)   # last term: f32 accumulator

    tk = kp
    while tk > 128 and ktiled_need(tm_eff, tk) > budget:
        tk = _round_up(tk // 2, 128)
    while tm_eff > 8 and ktiled_need(tm_eff, tk) > budget:
        tm_eff = max(8, _round_up(tm_eff // 2, 8))

    k_pad = _round_up(input_dim, tk)
    if k_pad != input_dim:
        # Zero padding along K is mathematically neutral for the contraction.
        # TODO(synk): store parameters pre-padded at creation time so this
        # per-call HBM pass only ever applies to x.
        x = jnp.zeros((batch, k_pad), x.dtype).at[:, :input_dim].set(x)
        weight = jnp.zeros((output_dim, k_pad), weight.dtype).at[:, :input_dim].set(weight)

    return pl.pallas_call(
        _logreg_kernel_ktiled,
        out_shape=jax.ShapeDtypeStruct((batch, output_dim), x.dtype),
        grid=(pl.cdiv(batch, tm_eff), k_pad // tk),
        in_specs=[
            pl.BlockSpec((tm_eff, tk), lambda i, k: (i, k)),
            pl.BlockSpec((output_dim, tk), lambda i, k: (0, k)),
            pl.BlockSpec((1, output_dim), lambda i, k: (0, 0)),
        ],
        out_specs=pl.BlockSpec((tm_eff, output_dim), lambda i, k: (i, 0)),
        scratch_shapes=[pltpu.VMEM((tm_eff, output_dim), jnp.float32)],
        compiler_params=pltpu.CompilerParams(
            dimension_semantics=("parallel", "arbitrary"),
            vmem_limit_bytes=budget,
        ),
    )(x, weight, bias2d)


if __name__ == "__main__":
    # Deterministic synthetic parameters & inputs (PyTorch nn.Linear shapes).
    batch, input_dim, output_dim = 8, 32, 4

    key = jax.random.PRNGKey(0)
    kx, kw, kb, kx2 = jax.random.split(key, 4)

    x = jax.random.normal(kx, (batch, input_dim), dtype=jnp.float32)
    bound = 1.0 / (input_dim ** 0.5)
    weight = jax.random.uniform(kw, (output_dim, input_dim),
                                minval=-bound, maxval=bound, dtype=jnp.float32)
    bias = jax.random.uniform(kb, (output_dim,),
                              minval=-bound, maxval=bound, dtype=jnp.float32)

    out = logistic_regression(x, weight, bias)
    jax.block_until_ready(out)

    ref = jax.nn.sigmoid(x @ weight.T + bias)
    assert out.shape == (batch, output_dim)
    assert jnp.allclose(out, ref, atol=1e-5, rtol=1e-5), \
        float(jnp.max(jnp.abs(out - ref)))

    # Also exercise the ragged-batch path (grid = cdiv(batch, tm), masked last
    # block) with a batch size that is not a multiple of the tile.
    x2 = jax.random.normal(kx2, (19, input_dim), dtype=jnp.float32)
    out2 = logistic_regression(x2, weight, bias, tm=8)
    jax.block_until_ready(out2)
    ref2 = jax.nn.sigmoid(x2 @ weight.T + bias)
    assert out2.shape == (19, output_dim)
    assert jnp.allclose(out2, ref2, atol=1e-5, rtol=1e-5), \
        float(jnp.max(jnp.abs(out2 - ref2)))

    print("KERNEL_OK")
</pallas_src>

<mosaic_0001>
module attributes {stable_mosaic.version = 11 : i64} {
  func.func @_logreg_kernel(%arg0: i32, %arg1: memref<8x32xf32, #tpu.memory_space<vmem>>, %arg2: memref<4x32xf32, #tpu.memory_space<vmem>>, %arg3: memref<1x4xf32, #tpu.memory_space<vmem>>, %arg4: memref<8x4xf32, #tpu.memory_space<vmem>>) attributes {dimension_semantics = [#tpu.dimension_semantics<parallel>], iteration_bounds = array<i64: 1>, scalar_prefetch = 0 : i64, scratch_operands = 0 : i64, tpu.core_type = #tpu.core_type<tc>, window_params = [{transform_indices = @transform_0, window_bounds = array<i64: 8, 32>}, {pipeline_mode = #tpu.pipeline_mode<synchronous>, transform_indices = @transform_1, window_bounds = array<i64: 4, 32>}, {pipeline_mode = #tpu.pipeline_mode<synchronous>, transform_indices = @transform_2, window_bounds = array<i64: 1, 4>}, {transform_indices = @transform_3, window_bounds = array<i64: 8, 4>}]} {
    %c0 = arith.constant 0 : index
    %c0_0 = arith.constant 0 : index
    %0 = vector.load %arg1[%c0, %c0_0] : memref<8x32xf32, #tpu.memory_space<vmem>>, vector<8x32xf32>
    %c0_1 = arith.constant 0 : index
    %c0_2 = arith.constant 0 : index
    %1 = vector.load %arg2[%c0_1, %c0_2] : memref<4x32xf32, #tpu.memory_space<vmem>>, vector<4x32xf32>
    %cst = arith.constant dense<0.000000e+00> : vector<8x4xf32>
    %2 = tpu.matmul %0, %1, %cst {dimension_numbers = #tpu.dot_dimension_numbers<[1], [1], [0], [0], [0, 0, 1, 0], [], []>} : vector<8x32xf32>, vector<4x32xf32>, vector<8x4xf32> -> vector<8x4xf32>
    %c0_3 = arith.constant 0 : index
    %c0_4 = arith.constant 0 : index
    %3 = vector.load %arg3[%c0_3, %c0_4] : memref<1x4xf32, #tpu.memory_space<vmem>>, vector<1x4xf32>
    %4 = vector.broadcast %3 : vector<1x4xf32> to vector<8x4xf32>
    %5 = arith.addf %2, %4 : vector<8x4xf32>
    %cst_5 = arith.constant 0.000000e+00 : f32
    %6 = vector.broadcast %cst_5 : f32 to vector<8x4xf32>
    %7 = arith.subf %6, %5 : vector<8x4xf32>
    %8 = math.exp %7 : vector<8x4xf32>
    %cst_6 = arith.constant 1.000000e+00 : f32
    %9 = vector.broadcast %cst_6 : f32 to vector<8x4xf32>
    %10 = arith.addf %9, %8 : vector<8x4xf32>
    %cst_7 = arith.constant 1.000000e+00 : f32
    %11 = vector.broadcast %cst_7 : f32 to vector<8x4xf32>
    %12 = arith.divf %11, %10 : vector<8x4xf32>
    %c0_8 = arith.constant 0 : index
    %c0_9 = arith.constant 0 : index
    %13 = vector.load %arg4[%c0_8, %c0_9] : memref<8x4xf32, #tpu.memory_space<vmem>>, vector<8x4xf32>
    tpu.vector_store %arg4[%c0_8, %c0_9], %12 {strides = array<i32>} : memref<8x4xf32, #tpu.memory_space<vmem>>, vector<8x4xf32>,
    return
  }
  func.func @transform_0(%arg0: i32) -> (i32, i32) {
    %c0_i32 = arith.constant 0 : i32
    %c0_i32_0 = arith.constant 0 : i32
    return %arg0, %c0_i32 : i32, i32
  }
  func.func @transform_1(%arg0: i32) -> (i32, i32) {
    %c0_i32 = arith.constant 0 : i32
    %c0_i32_0 = arith.constant 0 : i32
    %c0_i32_1 = arith.constant 0 : i32
    return %c0_i32, %c0_i32_0 : i32, i32
  }
  func.func @transform_2(%arg0: i32) -> (i32, i32) {
    %c0_i32 = arith.constant 0 : i32
    %c0_i32_0 = arith.constant 0 : i32
    %c0_i32_1 = arith.constant 0 : i32
    return %c0_i32, %c0_i32_0 : i32, i32
  }
  func.func @transform_3(%arg0: i32) -> (i32, i32) {
    %c0_i32 = arith.constant 0 : i32
    %c0_i32_0 = arith.constant 0 : i32
    return %arg0, %c0_i32 : i32, i32
  }
}

</mosaic_0001>

<llo_original>
// kernel: logistic_regression.1
$region0: #{logistic_regression.1}
  #allocation0 [shape = 'u32[]', space=smem, size = 0x4, offset = 0x4, fixed_abs, tag = 'smem constant byte address 0x4 - core index']
  #allocation1 [shape = 'u32[144,128]{1,0:T(1,128)}', space=vmem, size = 0x12000, scoped, tag = 'internal scratch']
  %s0 = inlined_call_operand.hbm [shape: f32[8,32], index: 0, kind: input, shape index: {}]
  %s1 = inlined_call_operand.vmem [shape: f32[4,32], index: 1, kind: input, shape index: {}]
  %s2 = inlined_call_operand.vmem [shape: f32[1,4], index: 2, kind: input, shape index: {}]
  %s3 = inlined_call_operand.vmem [shape: f32[8,4], index: 3, kind: output, shape index: {}]
  %s4 = sld [smem:[#allocation0]]
  $region26: #{logistic_regression.1} parent=0
    _
  %s6 = ssub.s32 1, %s4
  %s7 = scalar_select 0, %s6, %s4
  $region1: #{logistic_regression.1} parent=0
    #allocation2 [shape = 'u8[4096]{0}', space=vmem, size = 0x1000, scoped, tag = 'input window, operand 0, single buffered']
    #allocation3 [shape = 's32[1]{0}', space=sflag, size = 0x4, scoped, tag = 'scoped memory for logistic_regression.1']
    %8 = vsyncpa [#allocation3], 0
    // Predicated region
    $region2: #{logistic_regression.1} parent=1 // pred_check
      _
    $region3: #{logistic_regression.1} parent=1 // pred_check_branch
      %10 = sbr.rel (0) target = $region5
    $region4: #{logistic_regression.1} parent=1 // pred_region
      %s12 = ssub.s32 128, 128
      %13 = vsyncadd [#allocation3], %s12
      %s15 = sshll.u32 [#allocation2], 4
      %s16 = int_to_ptr.vmem [resolvable:$true] %s15
      %18 = dma.hbm_to_vmem [thread:$0]  %s0, 128, %s16, [#allocation3]
    $region5: #{logistic_regression.1} parent=1 // pred_fallthru
      _
    // Predicated region
    $region6: #{logistic_regression.1} parent=1 // pred_check
      _
    $region7: #{logistic_regression.1} parent=1 // pred_check_branch
      %20 = sbr.rel (0) target = $region9
    $region8: #{logistic_regression.1} parent=1 // pred_region
      _
    $region9: #{logistic_regression.1} parent=1 // pred_fallthru
      _
    // Predicated region
    $region10: #{logistic_regression.1} parent=1 // pred_check
      _
    $region11: #{logistic_regression.1} parent=1 // pred_check_branch
      %22 = sbr.rel (0) target = $region13
    $region12: #{logistic_regression.1} parent=1 // pred_region
      _
    $region13: #{logistic_regression.1} parent=1 // pred_fallthru
      _
    // Predicated region
    $region14: #{logistic_regression.1} parent=1 // pred_check
      _
    $region15: #{logistic_regression.1} parent=1 // pred_check_branch
      %24 = sbr.rel (0) target = $region17
    $region16: #{logistic_regression.1} parent=1 // pred_region
      %25 = dma.done [#allocation3], 128
    $region17: #{logistic_regression.1} parent=1 // pred_fallthru
      _
    %v26 = vld [vmem:[#allocation2] sm:$0xff]
    %v27 = vld [vmem:[%s1] sm:$0xf]
    %v28 = vld [vmem:[%s2] sm:$0x1]
    %v30 = vlaneseq
    %v31 = vshrl.u32 %v30, 7
    %v32 = vsub.s32 0, %v31
    %v33 = vrot.slane %v28, %v32
    %vm35 = vcmask 261120
    %v37 = vsel %vm35, %v26, 0
    %v40 = vsel %vm35, %v27, 0
    %42 = vmatprep.subr.mxu0 0.0
    %43 = vmatpush1.xpose.msra.mxu0 %v40
    %44 = vmatprep.subr.mxu0 0.0
    %45 = vmatpush1.xpose.msra.mxu0 0.0
    %46 = vmatprep.subr.mxu0 0.0
    %47 = vmatpush1.xpose.msra.mxu0 0.0
    %48 = vmatprep.subr.mxu0 0.0
    %49 = vmatpush1.xpose.msra.mxu0 0.0
    %50 = vmatprep.subr.mxu0 0.0
    %51 = vmatpush1.xpose.msra.mxu0 0.0
    %52 = vmatprep.subr.mxu0 0.0
    %53 = vmatpush1.xpose.msra.mxu0 0.0
    %54 = vmatprep.subr.mxu0 0.0
    %55 = vmatpush1.xpose.msra.mxu0 0.0
    %56 = vmatprep.subr.mxu0 0.0
    %57 = vmatpush1.xpose.msra.mxu0 0.0
    %58 = vmatprep.subr.mxu0 0.0
    %59 = vmatpush1.xpose.msra.mxu0 0.0
    %60 = vmatprep.subr.mxu0 0.0
    %61 = vmatpush1.xpose.msra.mxu0 0.0
    %62 = vmatprep.subr.mxu0 0.0
    %63 = vmatpush1.xpose.msra.mxu0 0.0
    %64 = vmatprep.subr.mxu0 0.0
    %65 = vmatpush1.xpose.msra.mxu0 0.0
    %66 = vmatprep.subr.mxu0 0.0
    %67 = vmatpush1.xpose.msra.mxu0 0.0
    %68 = vmatprep.subr.mxu0 0.0
    %69 = vmatpush1.xpose.msra.mxu0 0.0
    %70 = vmatprep.subr.mxu0 0.0
    %71 = vmatpush1.xpose.msra.mxu0 0.0
    %72 = vmatprep.subr.mxu0 0.0
    %73 = vmatpush1.xpose.msra.mxu0 0.0
    %74 = vmatprep.subr.mxu0 0.0
    %75 = vmatpush1.xpose.msra.mxu0 0.0
    %76 = vmatprep.subr.mxu0 0.0
    %77 = vmatpush1.xpose.msra.mxu0 0.0
    %78 = vmatprep.subr.mxu0 0.0
    %79 = vmatpush1.xpose.msra.mxu0 0.0
    %80 = vmatprep.subr.mxu0 0.0
    %81 = vmatpush1.xpose.msra.mxu0 0.0
    %82 = vmatprep.subr.mxu0 0.0
    %83 = vmatpush1.xpose.msra.mxu0 0.0
    %84 = vmatprep.subr.mxu0 0.0
    %85 = vmatpush1.xpose.msra.mxu0 0.0
    %86 = vmatprep.subr.mxu0 0.0
    %87 = vmatpush1.xpose.msra.mxu0 0.0
    %88 = vmatprep.subr.mxu0 0.0
    %89 = vmatpush1.xpose.msra.mxu0 0.0
    %90 = vmatprep.subr.mxu0 0.0
    %91 = vmatpush1.xpose.msra.mxu0 0.0
    %92 = vmatprep.subr.mxu0 0.0
    %93 = vmatpush1.xpose.msra.mxu0 0.0
    %94 = vmatprep.subr.mxu0 0.0
    %95 = vmatpush1.xpose.msra.mxu0 0.0
    %96 = vmatprep.subr.mxu0 0.0
    %97 = vmatpush1.xpose.msra.mxu0 0.0
    %98 = vmatprep.subr.mxu0 0.0
    %99 = vmatpush1.xpose.msra.mxu0 0.0
    %100 = vmatprep.subr.mxu0 0.0
    %101 = vmatpush1.xpose.msra.mxu0 0.0
    %102 = vmatprep.subr.mxu0 0.0
    %103 = vmatpush1.xpose.msra.mxu0 0.0
    %104 = vmatprep.subr.mxu0 0.0
    %105 = vmatpush1.xpose.msra.mxu0 0.0
    %106 = vmatprep.mubr.f32.mxu0 0.0
    %107 = vmatmul.mubr.f32.gmra.mrb[0].mxu0 %v37
    %v108 = vpop.f32.mrb[0].mxu0
    %v109 = vadd.f32 %v33, %v108
    %v110 = vpop.f32.mrb[0].mxu0
    %111 = vdwg.mxu0
    %v112 = vsub.f32 0.0, %v109
    %v113 = vmul.f32 %v112, 1.442695
    %v114 = vpow.pop %v113
    %v115 = vadd.f32 %v114, 1.0
    %v116 = vrcp.pop %v115
    %v117 = vmul.f32 1.0, %v116
    %vm118 = vcmask 31744
    %119 = vst.msk [vmem:[%s3] sm:$0xff] %vm118, %v117
    // Predicated region
    $region18: #{logistic_regression.1} parent=1 // pred_check
      _
    $region19: #{logistic_regression.1} parent=1 // pred_check_branch
      %121 = sbr.rel (0) target = $region21
    $region20: #{logistic_regression.1} parent=1 // pred_region
      _
    $region21: #{logistic_regression.1} parent=1 // pred_fallthru
      _
    // Predicated region
    $region22: #{logistic_regression.1} parent=1 // pred_check
      _
    $region23: #{logistic_regression.1} parent=1 // pred_check_branch
      %123 = sbr.rel (0) target = $region25
    $region24: #{logistic_regression.1} parent=1 // pred_region
      _
    $region25: #{logistic_regression.1} parent=1 // pred_fallthru
      _
    %124 = vsyncpa [#allocation3], 1

</llo_original>
